<compile_context>
chip_gen: v5e
topology: v5e:2x2
jax: 0.10.0
libtpu: 0.0.40
codegen_flags: <defaults>
</compile_context>

<pallas_src>
import functools

import jax
import jax.numpy as jnp
from jax.experimental import pallas as pl
from jax.experimental.pallas import tpu as pltpu


def _rope_roll_kernel(cos_ref, sin_ref, q_ref, k_ref, qo_ref, ko_ref, *, half):
    """Full-head rotary (ro_dim == D, lane-aligned).

    cos_ref : (tS, D)  duplicated cos table  [ cos | cos ]
    sin_ref : (tS, D)  sign-folded sin table [ -sin | sin ]
    q_ref / k_ref / qo_ref / ko_ref : (1, tS, H, D)
    """
    # Hoisted once per grid step, shared by q and k (broadcast over heads).
    c = cos_ref[...][:, None, :]          # (tS, 1, D)
    s = sin_ref[...][:, None, :]          # (tS, 1, D)

    for x_ref, o_ref in ((q_ref, qo_ref), (k_ref, ko_ref)):
        x = x_ref[0]                      # (tS, H, D)
        # rotate_half(x) == roll(x, half) with the sign folded into `s`.
        # The roll runs on the (otherwise idle) XLU slot; the rest is VPU.
        rot = pltpu.roll(x, shift=half, axis=x.ndim - 1)
        o_ref[0] = (x * c + rot * s).astype(o_ref.dtype)


def _rope_slice_kernel(cos_ref, sin_ref, q_ref, k_ref, qo_ref, ko_ref, *, ro_dim):
    """Partial / non-lane-aligned rotary dim fallback (no concatenates).

    cos_ref / sin_ref : (tS, ro_dim // 2) plain tables.
    q_ref / k_ref / qo_ref / ko_ref : (1, tS, H, D) with ro_dim <= D.
    """
    half = ro_dim // 2
    c = cos_ref[...][:, None, :]          # (tS, 1, half)
    s = sin_ref[...][:, None, :]          # (tS, 1, half)

    for x_ref, o_ref in ((q_ref, qo_ref), (k_ref, ko_ref)):
        x = x_ref[0]                      # (tS, H, D)
        D = x.shape[-1]
        x1 = x[..., :half]
        x2 = x[..., half:ro_dim]
        # out = [x1*cos - x2*sin, x2*cos + x1*sin, tail] via direct slice stores.
        o_ref[0, :, :, :half] = (x1 * c - x2 * s).astype(o_ref.dtype)
        o_ref[0, :, :, half:ro_dim] = (x2 * c + x1 * s).astype(o_ref.dtype)
        if ro_dim < D:
            o_ref[0, :, :, ro_dim:] = x[..., ro_dim:].astype(o_ref.dtype)


def _pick_seq_tile(S, H, D, itemsize, budget_bytes=16 * 1024 * 1024):
    """Largest seqlen tile whose 8 double-buffered q/k blocks fit the budget.

    A 16 MiB budget keeps the pipeline well inside the 32 MiB scoped-VMEM
    default on every generation (v5e/v6e/v7x); cos/sin blocks are negligible.
    """
    max_rows = max(1, budget_bytes // (8 * H * D * itemsize))
    if max_rows >= S:
        return S
    # cos/sin blocks are (tS, ...); tS is their sublane dim, so it must be a
    # multiple of 8 (or equal to S) to satisfy the (8, 128) tiling rule.
    for cand in range(int(max_rows), 0, -1):
        if S % cand == 0 and cand % 8 == 0:
            return cand
    return S  # no suitable divisor found: one big tile (rare, odd S only)


class RotaryEmbedding:
    """JAX/Pallas port of the PyTorch RotaryEmbedding module (scale_base=None)."""

    def __init__(self, dim, base=10000.0, interleaved=False, scale_base=None,
                 scaling_factor=1.0, pos_idx_in_fp32=True):
        assert scale_base is None, "XPos (scale_base) path not supported"
        # TODO(synk): interleaved=True (GPT-J pairing) not implemented in kernel.
        assert not interleaved, "interleaved rotary not implemented"
        self.dim = dim
        self.base = float(base)
        self.scaling_factor = scaling_factor
        self.pos_idx_in_fp32 = pos_idx_in_fp32
        # inv_freq buffer, deterministic (matches _compute_inv_freq)
        self.inv_freq = 1.0 / (self.base ** (
            jnp.arange(0, dim, 2, dtype=jnp.float32) / dim))

    def _cos_sin(self, seqlen, dtype):
        if self.pos_idx_in_fp32:
            t = jnp.arange(seqlen, dtype=jnp.float32) / self.scaling_factor
            inv_freq = self.inv_freq.astype(jnp.float32)
        else:
            t = jnp.arange(seqlen, dtype=self.inv_freq.dtype) / self.scaling_factor
            inv_freq = self.inv_freq
        freqs = jnp.outer(t, inv_freq)                      # (seqlen, dim/2)
        return jnp.cos(freqs).astype(dtype), jnp.sin(freqs).astype(dtype)

    def __call__(self, q, k, seqlen_offset=0, seq_tile=None, alias_inputs=False):
        """q, k: (batch, seqlen, nheads, headdim). Returns rotated (q, k)."""
        B, S, H, D = q.shape
        assert k.shape == q.shape
        ro_dim = self.dim
        assert ro_dim <= D and ro_dim % 2 == 0
        half = ro_dim // 2

        cos, sin = self._cos_sin(S + seqlen_offset, q.dtype)
        cos = cos[seqlen_offset:]                           # (S, ro_dim/2)
        sin = sin[seqlen_offset:]

        use_roll = (ro_dim == D) and (D % 128 == 0)
        if use_roll:
            # Duplicated / sign-folded tables, built ONCE in XLA (hoisted out of
            # the kernel): cos_t = [cos|cos], sin_t = [-sin|sin], both (S, D).
            cos_t = jnp.concatenate([cos, cos], axis=-1)
            sin_t = jnp.concatenate([-sin, sin], axis=-1)
            table_dim = ro_dim
            kernel = functools.partial(_rope_roll_kernel, half=half)
        else:
            cos_t, sin_t = cos, sin                         # (S, ro_dim/2)
            table_dim = half
            kernel = functools.partial(_rope_slice_kernel, ro_dim=ro_dim)

        itemsize = jnp.dtype(q.dtype).itemsize
        if seq_tile is not None:
            tS = int(seq_tile)
            assert S % tS == 0 and (tS == S or tS % 8 == 0), \
                "seq_tile must divide S and be a multiple of 8 (or equal S)"
        else:
            tS = _pick_seq_tile(S, H, D, itemsize)
        nS = S // tS

        qk_spec = pl.BlockSpec((1, tS, H, D), lambda s, b: (b, s, 0, 0))
        cs_spec = pl.BlockSpec((tS, table_dim), lambda s, b: (s, 0))

        # In-place aliasing is only a win when q/k are dead at the call
        # boundary (then XLA reuses the buffers); otherwise it forces copies.
        io_aliases = {2: 0, 3: 1} if alias_inputs else {}

        qo, ko = pl.pallas_call(
            kernel,
            out_shape=(
                jax.ShapeDtypeStruct((B, S, H, D), q.dtype),
                jax.ShapeDtypeStruct((B, S, H, D), k.dtype),
            ),
            grid_spec=pl.GridSpec(
                grid=(nS, B),   # batch innermost: cos/sin block reused across b
                in_specs=[cs_spec, cs_spec, qk_spec, qk_spec],
                out_specs=[qk_spec, qk_spec],
            ),
            input_output_aliases=io_aliases,
            compiler_params=pltpu.CompilerParams(
                dimension_semantics=("parallel", "parallel"),
                vmem_limit_bytes=32 * 1024 * 1024),
        )(cos_t, sin_t, q, k)
        return qo, ko


def _rope_reference(q, k, cos, sin, ro_dim):
    """Pure-JAX reference matching apply_rotary_emb_torch (non-interleaved)."""
    half = ro_dim // 2
    c = jnp.concatenate([cos, cos], axis=-1)[None, :, None, :]
    s = jnp.concatenate([sin, sin], axis=-1)[None, :, None, :]

    def apply(x):
        x_ro = x[..., :ro_dim]
        x1, x2 = x_ro[..., :half], x_ro[..., half:]
        rot = jnp.concatenate([-x2, x1], axis=-1)
        out = x_ro * c + rot * s
        return jnp.concatenate([out, x[..., ro_dim:]], axis=-1)

    return apply(q), apply(k)


if __name__ == "__main__":
    key = jax.random.PRNGKey(0)
    k1, k2, k3, k4 = jax.random.split(key, 4)

    # --- Test 1: small shapes, full rotary dim (slice path, f32) ---
    B, S, H, D = 2, 8, 4, 32
    q = jax.random.normal(k1, (B, S, H, D), dtype=jnp.float32)
    k = jax.random.normal(k2, (B, S, H, D), dtype=jnp.float32)

    rope = RotaryEmbedding(dim=32)
    cos_r, sin_r = rope._cos_sin(S, q.dtype)
    q_ref, k_ref = _rope_reference(q, k, cos_r, sin_r, 32)

    q_out, k_out = rope(q, k, seqlen_offset=0)
    jax.block_until_ready((q_out, k_out))
    assert jnp.allclose(q_out, q_ref, atol=1e-5, rtol=1e-5)
    assert jnp.allclose(k_out, k_ref, atol=1e-5, rtol=1e-5)

    # --- Test 2: partial rotary dim (passthrough tail path) ---
    rope_p = RotaryEmbedding(dim=16)
    cos_p, sin_p = rope_p._cos_sin(S, q.dtype)
    qp_ref, kp_ref = _rope_reference(q, k, cos_p, sin_p, 16)
    qp_out, kp_out = rope_p(q, k, seqlen_offset=0)
    jax.block_until_ready((qp_out, kp_out))
    assert jnp.allclose(qp_out, qp_ref, atol=1e-5, rtol=1e-5)
    assert jnp.allclose(kp_out, kp_ref, atol=1e-5, rtol=1e-5)

    # --- Test 3: production-style layout (roll path, seqlen tiling, bf16) ---
    Bp, Sp, Hp, Dp = 2, 256, 8, 128
    qb = jax.random.normal(k3, (Bp, Sp, Hp, Dp), dtype=jnp.bfloat16)
    kb = jax.random.normal(k4, (Bp, Sp, Hp, Dp), dtype=jnp.bfloat16)
    rope_b = RotaryEmbedding(dim=128)
    cos_b, sin_b = rope_b._cos_sin(Sp, qb.dtype)
    qb_ref, kb_ref = _rope_reference(qb, kb, cos_b, sin_b, 128)
    qb_out, kb_out = rope_b(qb, kb, seqlen_offset=0, seq_tile=64)  # 4 S-tiles
    jax.block_until_ready((qb_out, kb_out))
    assert jnp.allclose(qb_out.astype(jnp.float32), qb_ref.astype(jnp.float32),
                        atol=3e-2, rtol=3e-2)
    assert jnp.allclose(kb_out.astype(jnp.float32), kb_ref.astype(jnp.float32),
                        atol=3e-2, rtol=3e-2)

    # --- Test 4: seqlen_offset (decode-style), roll path, single tile ---
    qo_off, ko_off = rope_b(qb[:, :64], kb[:, :64], seqlen_offset=32)
    cos_full, sin_full = rope_b._cos_sin(64 + 32, qb.dtype)
    qo_ref, ko_ref2 = _rope_reference(qb[:, :64], kb[:, :64],
                                      cos_full[32:], sin_full[32:], 128)
    jax.block_until_ready((qo_off, ko_off))
    assert jnp.allclose(qo_off.astype(jnp.float32), qo_ref.astype(jnp.float32),
                        atol=3e-2, rtol=3e-2)
    assert jnp.allclose(ko_off.astype(jnp.float32), ko_ref2.astype(jnp.float32),
                        atol=3e-2, rtol=3e-2)

    print("KERNEL_OK")
</pallas_src>

<mosaic_0001>
module attributes {stable_mosaic.version = 11 : i64} {
  func.func @_rope_slice_kernel(%arg0: i32, %arg1: i32, %arg2: memref<8x16xf32, #tpu.memory_space<vmem>>, %arg3: memref<8x16xf32, #tpu.memory_space<vmem>>, %arg4: memref<1x8x4x32xf32, #tpu.memory_space<vmem>>, %arg5: memref<1x8x4x32xf32, #tpu.memory_space<vmem>>, %arg6: memref<1x8x4x32xf32, #tpu.memory_space<vmem>>, %arg7: memref<1x8x4x32xf32, #tpu.memory_space<vmem>>) attributes {dimension_semantics = [#tpu.dimension_semantics<parallel>, #tpu.dimension_semantics<parallel>], iteration_bounds = array<i64: 1, 2>, scalar_prefetch = 0 : i64, scratch_operands = 0 : i64, tpu.core_type = #tpu.core_type<tc>, window_params = [{transform_indices = @transform_0, window_bounds = array<i64: 8, 16>}, {transform_indices = @transform_1, window_bounds = array<i64: 8, 16>}, {transform_indices = @transform_2, window_bounds = array<i64: 1, 8, 4, 32>}, {transform_indices = @transform_3, window_bounds = array<i64: 1, 8, 4, 32>}, {transform_indices = @transform_4, window_bounds = array<i64: 1, 8, 4, 32>}, {transform_indices = @transform_5, window_bounds = array<i64: 1, 8, 4, 32>}]} {
    %c0 = arith.constant 0 : index
    %c0_0 = arith.constant 0 : index
    %0 = vector.load %arg2[%c0, %c0_0] : memref<8x16xf32, #tpu.memory_space<vmem>>, vector<8x16xf32>
    %1 = vector.shape_cast %0 : vector<8x16xf32> to vector<8x1x16xf32>
    %c0_1 = arith.constant 0 : index
    %c0_2 = arith.constant 0 : index
    %2 = vector.load %arg3[%c0_1, %c0_2] : memref<8x16xf32, #tpu.memory_space<vmem>>, vector<8x16xf32>
    %3 = vector.shape_cast %2 : vector<8x16xf32> to vector<8x1x16xf32>
    %c0_3 = arith.constant 0 : index
    %c0_4 = arith.constant 0 : index
    %c0_5 = arith.constant 0 : index
    %c0_6 = arith.constant 0 : index
    %4 = vector.load %arg4[%c0_3, %c0_4, %c0_5, %c0_6] : memref<1x8x4x32xf32, #tpu.memory_space<vmem>>, vector<1x8x4x32xf32>
    %5 = vector.shape_cast %4 : vector<1x8x4x32xf32> to vector<8x4x32xf32>
    %6 = vector.extract_strided_slice %5 {offsets = [0, 0, 0], sizes = [8, 4, 16], strides = [1, 1, 1]} : vector<8x4x32xf32> to vector<8x4x16xf32>
    %7 = vector.extract_strided_slice %5 {offsets = [0, 0, 16], sizes = [8, 4, 16], strides = [1, 1, 1]} : vector<8x4x32xf32> to vector<8x4x16xf32>
    %8 = vector.broadcast %1 : vector<8x1x16xf32> to vector<8x4x16xf32>
    %9 = arith.mulf %6, %8 : vector<8x4x16xf32>
    %10 = vector.broadcast %3 : vector<8x1x16xf32> to vector<8x4x16xf32>
    %11 = arith.mulf %7, %10 : vector<8x4x16xf32>
    %12 = arith.subf %9, %11 : vector<8x4x16xf32>
    %c0_7 = arith.constant 0 : index
    %c0_8 = arith.constant 0 : index
    %c0_9 = arith.constant 0 : index
    %c0_10 = arith.constant 0 : index
    %13 = vector.load %arg6[%c0_7, %c0_8, %c0_9, %c0_10] : memref<1x8x4x32xf32, #tpu.memory_space<vmem>>, vector<1x8x4x16xf32>
    %14 = vector.shape_cast %13 : vector<1x8x4x16xf32> to vector<8x4x16xf32>
    %15 = vector.shape_cast %12 : vector<8x4x16xf32> to vector<1x8x4x16xf32>
    tpu.vector_store %arg6[%c0_7, %c0_8, %c0_9, %c0_10], %15 {strides = array<i32>} : memref<1x8x4x32xf32, #tpu.memory_space<vmem>>, vector<1x8x4x16xf32>,
    %16 = vector.broadcast %1 : vector<8x1x16xf32> to vector<8x4x16xf32>
    %17 = arith.mulf %7, %16 : vector<8x4x16xf32>
    %18 = vector.broadcast %3 : vector<8x1x16xf32> to vector<8x4x16xf32>
    %19 = arith.mulf %6, %18 : vector<8x4x16xf32>
    %20 = arith.addf %17, %19 : vector<8x4x16xf32>
    %c0_11 = arith.constant 0 : index
    %c0_12 = arith.constant 0 : index
    %c0_13 = arith.constant 0 : index
    %c16 = arith.constant 16 : index
    %21 = vector.load %arg6[%c0_11, %c0_12, %c0_13, %c16] : memref<1x8x4x32xf32, #tpu.memory_space<vmem>>, vector<1x8x4x16xf32>
    %22 = vector.shape_cast %21 : vector<1x8x4x16xf32> to vector<8x4x16xf32>
    %23 = vector.shape_cast %20 : vector<8x4x16xf32> to vector<1x8x4x16xf32>
    tpu.vector_store %arg6[%c0_11, %c0_12, %c0_13, %c16], %23 {strides = array<i32>} : memref<1x8x4x32xf32, #tpu.memory_space<vmem>>, vector<1x8x4x16xf32>,
    %c0_14 = arith.constant 0 : index
    %c0_15 = arith.constant 0 : index
    %c0_16 = arith.constant 0 : index
    %c0_17 = arith.constant 0 : index
    %24 = vector.load %arg5[%c0_14, %c0_15, %c0_16, %c0_17] : memref<1x8x4x32xf32, #tpu.memory_space<vmem>>, vector<1x8x4x32xf32>
    %25 = vector.shape_cast %24 : vector<1x8x4x32xf32> to vector<8x4x32xf32>
    %26 = vector.extract_strided_slice %25 {offsets = [0, 0, 0], sizes = [8, 4, 16], strides = [1, 1, 1]} : vector<8x4x32xf32> to vector<8x4x16xf32>
    %27 = vector.extract_strided_slice %25 {offsets = [0, 0, 16], sizes = [8, 4, 16], strides = [1, 1, 1]} : vector<8x4x32xf32> to vector<8x4x16xf32>
    %28 = vector.broadcast %1 : vector<8x1x16xf32> to vector<8x4x16xf32>
    %29 = arith.mulf %26, %28 : vector<8x4x16xf32>
    %30 = vector.broadcast %3 : vector<8x1x16xf32> to vector<8x4x16xf32>
    %31 = arith.mulf %27, %30 : vector<8x4x16xf32>
    %32 = arith.subf %29, %31 : vector<8x4x16xf32>
    %c0_18 = arith.constant 0 : index
    %c0_19 = arith.constant 0 : index
    %c0_20 = arith.constant 0 : index
    %c0_21 = arith.constant 0 : index
    %33 = vector.load %arg7[%c0_18, %c0_19, %c0_20, %c0_21] : memref<1x8x4x32xf32, #tpu.memory_space<vmem>>, vector<1x8x4x16xf32>
    %34 = vector.shape_cast %33 : vector<1x8x4x16xf32> to vector<8x4x16xf32>
    %35 = vector.shape_cast %32 : vector<8x4x16xf32> to vector<1x8x4x16xf32>
    tpu.vector_store %arg7[%c0_18, %c0_19, %c0_20, %c0_21], %35 {strides = array<i32>} : memref<1x8x4x32xf32, #tpu.memory_space<vmem>>, vector<1x8x4x16xf32>,
    %36 = vector.broadcast %1 : vector<8x1x16xf32> to vector<8x4x16xf32>
    %37 = arith.mulf %27, %36 : vector<8x4x16xf32>
    %38 = vector.broadcast %3 : vector<8x1x16xf32> to vector<8x4x16xf32>
    %39 = arith.mulf %26, %38 : vector<8x4x16xf32>
    %40 = arith.addf %37, %39 : vector<8x4x16xf32>
    %c0_22 = arith.constant 0 : index
    %c0_23 = arith.constant 0 : index
    %c0_24 = arith.constant 0 : index
    %c16_25 = arith.constant 16 : index
    %41 = vector.load %arg7[%c0_22, %c0_23, %c0_24, %c16_25] : memref<1x8x4x32xf32, #tpu.memory_space<vmem>>, vector<1x8x4x16xf32>
    %42 = vector.shape_cast %41 : vector<1x8x4x16xf32> to vector<8x4x16xf32>
    %43 = vector.shape_cast %40 : vector<8x4x16xf32> to vector<1x8x4x16xf32>
    tpu.vector_store %arg7[%c0_22, %c0_23, %c0_24, %c16_25], %43 {strides = array<i32>} : memref<1x8x4x32xf32, #tpu.memory_space<vmem>>, vector<1x8x4x16xf32>,
    return
  }
  func.func @transform_0(%arg0: i32, %arg1: i32) -> (i32, i32) {
    %c0_i32 = arith.constant 0 : i32
    %c0_i32_0 = arith.constant 0 : i32
    return %arg0, %c0_i32 : i32, i32
  }
  func.func @transform_1(%arg0: i32, %arg1: i32) -> (i32, i32) {
    %c0_i32 = arith.constant 0 : i32
    %c0_i32_0 = arith.constant 0 : i32
    return %arg0, %c0_i32 : i32, i32
  }
  func.func @transform_2(%arg0: i32, %arg1: i32) -> (i32, i32, i32, i32) {
    %c0_i32 = arith.constant 0 : i32
    %c0_i32_0 = arith.constant 0 : i32
    %c0_i32_1 = arith.constant 0 : i32
    return %arg1, %arg0, %c0_i32, %c0_i32_0 : i32, i32, i32, i32
  }
  func.func @transform_3(%arg0: i32, %arg1: i32) -> (i32, i32, i32, i32) {
    %c0_i32 = arith.constant 0 : i32
    %c0_i32_0 = arith.constant 0 : i32
    %c0_i32_1 = arith.constant 0 : i32
    return %arg1, %arg0, %c0_i32, %c0_i32_0 : i32, i32, i32, i32
  }
  func.func @transform_4(%arg0: i32, %arg1: i32) -> (i32, i32, i32, i32) {
    %c0_i32 = arith.constant 0 : i32
    %c0_i32_0 = arith.constant 0 : i32
    %c0_i32_1 = arith.constant 0 : i32
    return %arg1, %arg0, %c0_i32, %c0_i32_0 : i32, i32, i32, i32
  }
  func.func @transform_5(%arg0: i32, %arg1: i32) -> (i32, i32, i32, i32) {
    %c0_i32 = arith.constant 0 : i32
    %c0_i32_0 = arith.constant 0 : i32
    %c0_i32_1 = arith.constant 0 : i32
    return %arg1, %arg0, %c0_i32, %c0_i32_0 : i32, i32, i32, i32
  }
}

</mosaic_0001>

<llo_original>
// kernel: tpu_custom_call.1
$region0: #{tpu_custom_call.1}
  #allocation0 [shape = 'u32[]', space=smem, size = 0x4, offset = 0x4, fixed_abs, tag = 'smem constant byte address 0x4 - core index']
  #allocation1 [shape = 'u32[72,128]{1,0:T(1,128)}', space=vmem, size = 0x9000, scoped, tag = 'internal scratch']
  %s0 = inlined_call_operand.hbm [shape: f32[8,16], index: 0, kind: input, shape index: {}]
  %s1 = inlined_call_operand.hbm [shape: f32[8,16], index: 1, kind: input, shape index: {}]
  %s2 = inlined_call_operand.hbm [shape: f32[2,8,4,32], index: 2, kind: input, shape index: {}]
  %s3 = inlined_call_operand.hbm [shape: f32[2,8,4,32], index: 3, kind: input, shape index: {}]
  %s4 = inlined_call_operand.hbm [shape: f32[2,8,4,32], index: 4, kind: output, shape index: {0}]
  %s5 = inlined_call_operand.hbm [shape: f32[2,8,4,32], index: 5, kind: output, shape index: {1}]
  %6 = xla_tuple %s4, %s5
  %s7 = sld [smem:[#allocation0]]
  $region73: #{tpu_custom_call.1} parent=0
    _
  %s9 = ssub.s32 1, %s7
  %s10 = scalar_select 0, %s9, %s7
  $region1: #{tpu_custom_call.1} parent=0
    #allocation2 [shape = 'u8[4096]{0}', space=vmem, size = 0x1000, scoped, tag = 'input window, operand 0, single buffered']
    #allocation3 [shape = 's32[2]{0}', space=sflag, size = 0x8, scoped, tag = 'scoped memory for tpu_custom_call.1']
    #allocation4 [shape = 's32[2]{0}', space=sflag, size = 0x8, scoped, tag = 'scoped memory for tpu_custom_call.1']
    #allocation5 [shape = 'u8[4096]{0}', space=vmem, size = 0x1000, scoped, tag = 'input window, operand 1, single buffered']
    #allocation6 [shape = 's32[1]{0}', space=sflag, size = 0x4, scoped, tag = 'scoped memory for tpu_custom_call.1']
    #allocation7 [shape = 'u8[32768]{0}', space=vmem, size = 0x8000, scoped, tag = 'input window, operand 2']
    #allocation8 [shape = 'u8[32768]{0}', space=vmem, size = 0x8000, scoped, tag = 'input window, operand 3']
    #allocation9 [shape = 'u8[32768]{0}', space=vmem, size = 0x8000, scoped, tag = 'output window, operand 0']
    #allocation10 [shape = 'u8[32768]{0}', space=vmem, size = 0x8000, scoped, tag = 'output window, operand 1']
    #allocation11 [shape = 's32[2]{0}', space=sflag, size = 0x8, scoped, tag = 'scoped memory for tpu_custom_call.1']
    %11 = vsyncpa [#allocation3], 0
    %12 = vsyncpa [#allocation6], 0
    %13 = vsyncpa [#allocation4], 0
    %s14 = scalar_lea.sflag [#allocation4], 1
    %15 = vsyncpa %s14, 0
    %16 = vsyncpa [#allocation11], 0
    %s17 = scalar_lea.sflag [#allocation11], 1
    %18 = vsyncpa %s17, 0
    loop: start=0, step=1, limit=4
    $region2: #{tpu_custom_call.1} parent=1 // loop_pre_header
      _
    $region3: #{tpu_custom_call.1} parent=1 // loop_header
      %s20 = sphi 0, %s24
      %p21 = scmp.ge.s32.totalorder %s20, 4
      %s27 = sphi 0, %s39
      %s28 = sphi 0, %s35
      %s29 = sphi 0, %s27
      %s30 = sphi 0, %s28
      %s31 = sphi 0, %s29
      %s32 = sphi 0, %s30
      %s42 = sphi 0, %s44
      %s45 = sphi 0, %s42
      %s46 = sphi 0, %s45
      %s62 = sphi 0, %s46
      %s68 = sphi 0, %s70
      %s71 = sphi 0, %s68
      %s72 = sphi 0, %s71
      %s88 = sphi 0, %s72
      %s96 = sphi 0, %s98
      %s99 = sphi 0, %s96
      %s100 = sphi 0, %s99
      %s116 = sphi 0, %s100
      %s124 = sphi 0, %s126
      %s127 = sphi 0, %s124
      %s128 = sphi 0, %s127
      %s144 = sphi 0, %s128
      %s152 = sphi 0, %s154
      %s155 = sphi 0, %s152
      %s156 = sphi 0, %s155
      %s172 = sphi 0, %s156
      %s180 = sphi 0, %s182
      %s183 = sphi 0, %s180
      %s184 = sphi 0, %s183
      %s200 = sphi 0, %s184
    $region4: #{tpu_custom_call.1} parent=1 // loop_header_branch
      %23 = sbr.rel (%p21) target = $region8
    $region5: #{tpu_custom_call.1} parent=1 // loop_body
      %s25 = ssub.s32 %s20, 1
      %s26 = ssub.s32 %s20, 2
      %s33 = sadd.s32 1, %s28
      %p34 = scmp.ge.s32.totalorder %s33, 2
      %s35 = scalar_select %p34, 0, %s33
      %s36 = sadd.s32 1, %s27
      %s37 = scalar_select %p34, %s36, %s27
      %p38 = scmp.ge.s32.totalorder %s37, 1
      %s39 = scalar_select %p38, 0, %s37
      %s40 = ssub.s32 %s27, %s39
      %p41 = scmp.eq.s32.totalorder %s40, 0
      %s43 = sadd.s32 %s42, 1
      %s44 = scalar_select %p41, %s42, %s43
      %p47 = pneg %p41
      %p48 = scmp.eq.s32.totalorder %s20, 1
      %p49 = por %p47, %p48
      %p50 = scmp.ne.s32.totalorder %s42, %s45
      %p51 = scmp.eq.s32.totalorder %s20, 0
      %p52 = por %p50, %p51
      %p53 = scmp.ne.s32.totalorder %s42, %s45
      %p54 = scmp.eq.s32.totalorder %s25, 1
      %p55 = por %p53, %p54
      %p56 = scmp.ne.s32.totalorder %s45, %s46
      %p57 = scmp.eq.s32.totalorder %s25, 0
      %p58 = por %p56, %p57
      %p59 = scmp.ne.s32.totalorder %s45, %s46
      %p60 = scmp.eq.s32.totalorder %s26, 1
      %p61 = por %p59, %p60
      %p63 = scmp.ne.s32.totalorder %s46, %s62
      %p64 = scmp.eq.s32.totalorder %s26, 0
      %p65 = por %p63, %p64
      %s66 = ssub.s32 %s27, %s39
      %p67 = scmp.eq.s32.totalorder %s66, 0
      %s69 = sadd.s32 %s68, 1
      %s70 = scalar_select %p67, %s68, %s69
      %p73 = pneg %p67
      %p74 = scmp.eq.s32.totalorder %s20, 1
      %p75 = por %p73, %p74
      %p76 = scmp.ne.s32.totalorder %s68, %s71
      %p77 = scmp.eq.s32.totalorder %s20, 0
      %p78 = por %p76, %p77
      %p79 = scmp.ne.s32.totalorder %s68, %s71
      %p80 = scmp.eq.s32.totalorder %s25, 1
      %p81 = por %p79, %p80
      %p82 = scmp.ne.s32.totalorder %s71, %s72
      %p83 = scmp.eq.s32.totalorder %s25, 0
      %p84 = por %p82, %p83
      %p85 = scmp.ne.s32.totalorder %s71, %s72
      %p86 = scmp.eq.s32.totalorder %s26, 1
      %p87 = por %p85, %p86
      %p89 = scmp.ne.s32.totalorder %s72, %s88
      %p90 = scmp.eq.s32.totalorder %s26, 0
      %p91 = por %p89, %p90
      %s92 = ssub.s32 %s28, %s35
      %s93 = ssub.s32 %s27, %s39
      %s94 = sor.u32 %s92, %s93
      %p95 = scmp.eq.s32.totalorder %s94, 0
      %s97 = sadd.s32 %s96, 1
      %s98 = scalar_select %p95, %s96, %s97
      %p101 = pneg %p95
      %p102 = scmp.eq.s32.totalorder %s20, 1
      %p103 = por %p101, %p102
      %p104 = scmp.ne.s32.totalorder %s96, %s99
      %p105 = scmp.eq.s32.totalorder %s20, 0
      %p106 = por %p104, %p105
      %p107 = scmp.ne.s32.totalorder %s96, %s99
      %p108 = scmp.eq.s32.totalorder %s25, 1
      %p109 = por %p107, %p108
      %p110 = scmp.ne.s32.totalorder %s99, %s100
      %p111 = scmp.eq.s32.totalorder %s25, 0
      %p112 = por %p110, %p111
      %p113 = scmp.ne.s32.totalorder %s99, %s100
      %p114 = scmp.eq.s32.totalorder %s26, 1
      %p115 = por %p113, %p114
      %p117 = scmp.ne.s32.totalorder %s100, %s116
      %p118 = scmp.eq.s32.totalorder %s26, 0
      %p119 = por %p117, %p118
      %s120 = ssub.s32 %s28, %s35
      %s121 = ssub.s32 %s27, %s39
      %s122 = sor.u32 %s120, %s121
      %p123 = scmp.eq.s32.totalorder %s122, 0
      %s125 = sadd.s32 %s124, 1
      %s126 = scalar_select %p123, %s124, %s125
      %p129 = pneg %p123
      %p130 = scmp.eq.s32.totalorder %s20, 1
      %p131 = por %p129, %p130
      %p132 = scmp.ne.s32.totalorder %s124, %s127
      %p133 = scmp.eq.s32.totalorder %s20, 0
      %p134 = por %p132, %p133
      %p135 = scmp.ne.s32.totalorder %s124, %s127
      %p136 = scmp.eq.s32.totalorder %s25, 1
      %p137 = por %p135, %p136
      %p138 = scmp.ne.s32.totalorder %s127, %s128
      %p139 = scmp.eq.s32.totalorder %s25, 0
      %p140 = por %p138, %p139
      %p141 = scmp.ne.s32.totalorder %s127, %s128
      %p142 = scmp.eq.s32.totalorder %s26, 1
      %p143 = por %p141, %p142
      %p145 = scmp.ne.s32.totalorder %s128, %s144
      %p146 = scmp.eq.s32.totalorder %s26, 0
      %p147 = por %p145, %p146
      %s148 = ssub.s32 %s28, %s35
      %s149 = ssub.s32 %s27, %s39
      %s150 = sor.u32 %s148, %s149
      %p151 = scmp.eq.s32.totalorder %s150, 0
      %s153 = sadd.s32 %s152, 1
      %s154 = scalar_select %p151, %s152, %s153
      %p157 = pneg %p151
      %p158 = scmp.eq.s32.totalorder %s20, 1
      %p159 = por %p157, %p158
      %p160 = scmp.ne.s32.totalorder %s152, %s155
      %p161 = scmp.eq.s32.totalorder %s20, 0
      %p162 = por %p160, %p161
      %p163 = scmp.ne.s32.totalorder %s152, %s155
      %p164 = scmp.eq.s32.totalorder %s25, 1
      %p165 = por %p163, %p164
      %p166 = scmp.ne.s32.totalorder %s155, %s156
      %p167 = scmp.eq.s32.totalorder %s25, 0
      %p168 = por %p166, %p167
      %p169 = scmp.ne.s32.totalorder %s155, %s156
      %p170 = scmp.eq.s32.totalorder %s26, 1
      %p171 = por %p169, %p170
      %p173 = scmp.ne.s32.totalorder %s156, %s172
      %p174 = scmp.eq.s32.totalorder %s26, 0
      %p175 = por %p173, %p174
      %s176 = ssub.s32 %s28, %s35
      %s177 = ssub.s32 %s27, %s39
      %s178 = sor.u32 %s176, %s177
      %p179 = scmp.eq.s32.totalorder %s178, 0
      %s181 = sadd.s32 %s180, 1
      %s182 = scalar_select %p179, %s180, %s181
      %p185 = pneg %p179
      %p186 = scmp.eq.s32.totalorder %s20, 1
      %p187 = por %p185, %p186
      %p188 = scmp.ne.s32.totalorder %s180, %s183
      %p189 = scmp.eq.s32.totalorder %s20, 0
      %p190 = por %p188, %p189
      %p191 = scmp.ne.s32.totalorder %s180, %s183
      %p192 = scmp.eq.s32.totalorder %s25, 1
      %p193 = por %p191, %p192
      %p194 = scmp.ne.s32.totalorder %s183, %s184
      %p195 = scmp.eq.s32.totalorder %s25, 0
      %p196 = por %p194, %p195
      %p197 = scmp.ne.s32.totalorder %s183, %s184
      %p198 = scmp.eq.s32.totalorder %s26, 1
      %p199 = por %p197, %p198
      %p201 = scmp.ne.s32.totalorder %s184, %s200
      %p202 = scmp.eq.s32.totalorder %s26, 0
      %p203 = por %p201, %p202
      %p204 = scmp.le.s32.totalorder 1, %s20
      %p205 = scmp.lt.s32.totalorder %s20, 3
      %p206 = pnand %p204, %p205
      %p207 = pneg %p206
      // Predicated region
      $region9: #{tpu_custom_call.1} parent=5 // pred_check
        _
      $region10: #{tpu_custom_call.1} parent=5 // pred_check_branch
        %209 = sbr.rel (%p206) target = $region12
      $region11: #{tpu_custom_call.1} parent=5 // pred_region
        %s210 = ssub.s32 %s20, 1
        // Predicated region
        $region13: #{tpu_custom_call.1} parent=11 // pred_check
          %p211 = pneg %p58
        $region14: #{tpu_custom_call.1} parent=11 // pred_check_branch
          %213 = sbr.rel (%p211) target = $region16
        $region15: #{tpu_custom_call.1} parent=11 // pred_region
          %215 = vsyncadd [#allocation3], 0
          %s216 = smul.addr %s29, 8
          %s217 = scalar_lea.hbm %s0, %s216
          %s219 = sshll.u32 %s217, 4
          %s220 = int_to_ptr.hbm [resolvable:$true] %s219
          %s221 = sshll.u32 [#allocation2], 4
          %s222 = int_to_ptr.vmem [resolvable:$true] %s221
          %224 = dma.hbm_to_vmem [thread:$0]  %s220, 128, %s222, [#allocation3]
        $region16: #{tpu_custom_call.1} parent=11 // pred_fallthru
          _
        // Predicated region
        $region17: #{tpu_custom_call.1} parent=11 // pred_check
          %p225 = pneg %p84
        $region18: #{tpu_custom_call.1} parent=11 // pred_check_branch
          %227 = sbr.rel (%p225) target = $region20
        $region19: #{tpu_custom_call.1} parent=11 // pred_region
          %229 = vsyncadd [#allocation6], 0
          %s230 = smul.addr %s29, 8
          %s231 = scalar_lea.hbm %s1, %s230
          %s233 = sshll.u32 %s231, 4
          %s234 = int_to_ptr.hbm [resolvable:$true] %s233
          %s235 = sshll.u32 [#allocation5], 4
          %s236 = int_to_ptr.vmem [resolvable:$true] %s235
          %238 = dma.hbm_to_vmem [thread:$0]  %s234, 128, %s236, [#allocation6]
        $region20: #{tpu_custom_call.1} parent=11 // pred_fallthru
          _
      $region12: #{tpu_custom_call.1} parent=5 // pred_fallthru
        _
      %p239 = scmp.lt.s32.totalorder %s20, 2
      // Predicated region
      $region21: #{tpu_custom_call.1} parent=5 // pred_check
        %p240 = pneg %p239
      $region22: #{tpu_custom_call.1} parent=5 // pred_check_branch
        %242 = sbr.rel (%p240) target = $region24
      $region23: #{tpu_custom_call.1} parent=5 // pred_region
        // Predicated region
        $region25: #{tpu_custom_call.1} parent=23 // pred_check
          %p243 = pneg %p106
        $region26: #{tpu_custom_call.1} parent=23 // pred_check_branch
          %245 = sbr.rel (%p243) target = $region28
        $region27: #{tpu_custom_call.1} parent=23 // pred_region
          %s246 = sand.u32 %s20, 1
          %s247 = scalar_lea.sflag [#allocation3], %s246
          %s248 = sand.u32 %s96, 1
          %s249 = smul.addr %s248, 32
          %s250 = scalar_lea.vmem [#allocation7], %s249
          %s251 = smul.u32 8, %s27
          %253 = vsyncadd %s247, 0
          %s254 = smul.addr %s28, 8
          %s255 = sadd.s32 %s251, %s254
          %s256 = smul.addr %s255, 4
          %s257 = scalar_lea.hbm %s2, %s256
          %s258 = sshll.u32 %s257, 4
          %s259 = int_to_ptr.hbm [resolvable:$true] %s258
          %s260 = sshll.u32 %s250, 4
          %s261 = int_to_ptr.vmem [resolvable:$true] %s260
          %266 = dma.hbm_to_vmem [thread:$0]  %s259, 512, %s261, %s247, 64, 64, 4
        $region28: #{tpu_custom_call.1} parent=23 // pred_fallthru
          _
        // Predicated region
        $region29: #{tpu_custom_call.1} parent=23 // pred_check
          %p267 = pneg %p134
        $region30: #{tpu_custom_call.1} parent=23 // pred_check_branch
          %269 = sbr.rel (%p267) target = $region32
        $region31: #{tpu_custom_call.1} parent=23 // pred_region
          %s270 = sand.u32 %s20, 1
          %s271 = scalar_lea.sflag [#allocation3], %s270
          %s272 = sand.u32 %s124, 1
          %s273 = smul.addr %s272, 32
          %s274 = scalar_lea.vmem [#allocation8], %s273
          %s275 = smul.u32 8, %s27
          %277 = vsyncadd %s271, 0
          %s278 = smul.addr %s28, 8
          %s279 = sadd.s32 %s275, %s278
          %s280 = smul.addr %s279, 4
          %s281 = scalar_lea.hbm %s3, %s280
          %s282 = sshll.u32 %s281, 4
          %s283 = int_to_ptr.hbm [resolvable:$true] %s282
          %s284 = sshll.u32 %s274, 4
          %s285 = int_to_ptr.vmem [resolvable:$true] %s284
          %290 = dma.hbm_to_vmem [thread:$0]  %s283, 512, %s285, %s271, 64, 64, 4
        $region32: #{tpu_custom_call.1} parent=23 // pred_fallthru
          _
      $region24: #{tpu_custom_call.1} parent=5 // pred_fallthru
        _
      %p291 = scmp.le.s32.totalorder 1, %s20
      %p292 = scmp.lt.s32.totalorder %s20, 3
      %p293 = pnand %p291, %p292
      %p294 = pneg %p293
      // Predicated region
      $region33: #{tpu_custom_call.1} parent=5 // pred_check
        _
      $region34: #{tpu_custom_call.1} parent=5 // pred_check_branch
        %296 = sbr.rel (%p293) target = $region36
      $region35: #{tpu_custom_call.1} parent=5 // pred_region
        %s297 = ssub.s32 %s20, 1
        // Predicated region
        $region37: #{tpu_custom_call.1} parent=35 // pred_check
          %p298 = pneg %p58
        $region38: #{tpu_custom_call.1} parent=35 // pred_check_branch
          %300 = sbr.rel (%p298) target = $region40
        $region39: #{tpu_custom_call.1} parent=35 // pred_region
          %302 = dma.done [#allocation3], 128
        $region40: #{tpu_custom_call.1} parent=35 // pred_fallthru
          _
        // Predicated region
        $region41: #{tpu_custom_call.1} parent=35 // pred_check
          %p303 = pneg %p84
        $region42: #{tpu_custom_call.1} parent=35 // pred_check_branch
          %305 = sbr.rel (%p303) target = $region44
        $region43: #{tpu_custom_call.1} parent=35 // pred_region
          %307 = dma.done [#allocation6], 128
        $region44: #{tpu_custom_call.1} parent=35 // pred_fallthru
          _
        %s308 = sand.u32 %s25, 1
        %s309 = scalar_lea.sflag [#allocation3], %s308
        %s310 = sand.u32 %s99, 1
        %s311 = smul.addr %s310, 32
        %s312 = scalar_lea.vmem [#allocation7], %s311
        // Predicated region
        $region45: #{tpu_custom_call.1} parent=35 // pred_check
          %p313 = pneg %p112
        $region46: #{tpu_custom_call.1} parent=35 // pred_check_branch
          %315 = sbr.rel (%p313) target = $region48
        $region47: #{tpu_custom_call.1} parent=35 // pred_region
          %317 = dma.done %s309, 512
        $region48: #{tpu_custom_call.1} parent=35 // pred_fallthru
          _
        %s318 = sand.u32 %s25, 1
        %s319 = scalar_lea.sflag [#allocation3], %s318
        %s320 = sand.u32 %s127, 1
        %s321 = smul.addr %s320, 32
        %s322 = scalar_lea.vmem [#allocation8], %s321
        // Predicated region
        $region49: #{tpu_custom_call.1} parent=35 // pred_check
          %p323 = pneg %p140
        $region50: #{tpu_custom_call.1} parent=35 // pred_check_branch
          %325 = sbr.rel (%p323) target = $region52
        $region51: #{tpu_custom_call.1} parent=35 // pred_region
          %327 = dma.done %s319, 512
        $region52: #{tpu_custom_call.1} parent=35 // pred_fallthru
          _
        %p328 = pneg %p58
        %p329 = pneg %p55
        %p330 = pneg %p84
        %p331 = pneg %p81
        %s332 = sand.u32 %s25, 1
        %s333 = scalar_lea.sflag [#allocation3], %s332
        %s334 = sand.u32 %s99, 1
        %s335 = smul.addr %s334, 32
        %s336 = scalar_lea.vmem [#allocation7], %s335
        %p337 = pneg %p112
        %p338 = pneg %p109
        %s339 = sand.u32 %s25, 1
        %s340 = scalar_lea.sflag [#allocation3], %s339
        %s341 = sand.u32 %s127, 1
        %s342 = smul.addr %s341, 32
        %s343 = scalar_lea.vmem [#allocation8], %s342
        %p344 = pneg %p140
        %p345 = pneg %p137
        %p346 = pneg %p168
        %p347 = pneg %p165
        %s348 = sand.u32 %s155, 1
        %s349 = scalar_lea.sflag [#allocation4], %s348
        %s350 = sand.u32 %s155, 1
        %s351 = smul.addr %s350, 32
        %s352 = scalar_lea.vmem [#allocation9], %s351
        %p353 = pneg %p196
        %p354 = pneg %p193
        %s355 = sand.u32 %s183, 1
        %s356 = scalar_lea.sflag [#allocation11], %s355
        %s357 = sand.u32 %s183, 1
        %s358 = smul.addr %s357, 32
        %s359 = scalar_lea.vmem [#allocation10], %s358
        %s360 = smul.u32 8, %s29
        %s361 = smul.u32 8, %s29
        %s362 = smul.u32 8, %s29
        %s363 = smul.u32 8, %s29
        %v364 = vld [vmem:[#allocation2] sm:$0xff]
        %v366 = vrot.slane %v364, 1
        %v367 = vrot.slane %v364, 2
        %v368 = vrot.slane %v364, 3
        %v369 = vrot.slane %v364, 4
        %v370 = vrot.slane %v364, 5
        %v371 = vrot.slane %v364, 6
        %v372 = vrot.slane %v364, 7
        %v373 = vld [vmem:[#allocation5] sm:$0xff]
        %v375 = vrot.slane %v373, 1
        %v376 = vrot.slane %v373, 2
        %v377 = vrot.slane %v373, 3
        %v378 = vrot.slane %v373, 4
        %v379 = vrot.slane %v373, 5
        %v380 = vrot.slane %v373, 6
        %v381 = vrot.slane %v373, 7
        %v382 = vld [vmem:[%s312] sm:$0xf]
        %v383 = vld [vmem:[%s312 + $0x4] sm:$0xf]
        %v384 = vld [vmem:[%s312 + $0x8] sm:$0xf]
        %v385 = vld [vmem:[%s312 + $0xc] sm:$0xf]
        %v386 = vld [vmem:[%s312 + $0x10] sm:$0xf]
        %v387 = vld [vmem:[%s312 + $0x14] sm:$0xf]
        %v388 = vld [vmem:[%s312 + $0x18] sm:$0xf]
        %v389 = vld [vmem:[%s312 + $0x1c] sm:$0xf]
        %v390 = vperm.slane %v364, 0
        %v391 = vperm.slane %v366, 0
        %v392 = vperm.slane %v367, 0
        %v393 = vperm.slane %v368, 0
        %v394 = vperm.slane %v369, 0
        %v395 = vperm.slane %v370, 0
        %v396 = vperm.slane %v371, 0
        %v397 = vperm.slane %v372, 0
        %v406 = vmul.f32 %v382, %v390
        %v407 = vmul.f32 %v383, %v391
        %v408 = vmul.f32 %v384, %v392
        %v409 = vmul.f32 %v385, %v393
        %v410 = vmul.f32 %v386, %v394
        %v411 = vmul.f32 %v387, %v395
        %v412 = vmul.f32 %v388, %v396
        %v413 = vmul.f32 %v389, %v397
        %v414 = vperm.slane %v373, 0
        %v415 = vperm.slane %v375, 0
        %v416 = vperm.slane %v376, 0
        %v417 = vperm.slane %v377, 0
        %v418 = vperm.slane %v378, 0
        %v419 = vperm.slane %v379, 0
        %v420 = vperm.slane %v380, 0
        %v421 = vperm.slane %v381, 0
        %430 = vrot.lane.b32.xlu0 %v414, 16
        %v431 = vpop.permute.xlu0 %430
        %432 = vrot.lane.b32.xlu0 %v415, 16
        %v433 = vpop.permute.xlu0 %432
        %434 = vrot.lane.b32.xlu0 %v416, 16
        %v435 = vpop.permute.xlu0 %434
        %436 = vrot.lane.b32.xlu0 %v417, 16
        %v437 = vpop.permute.xlu0 %436
        %438 = vrot.lane.b32.xlu0 %v418, 16
        %v439 = vpop.permute.xlu0 %438
        %440 = vrot.lane.b32.xlu0 %v419, 16
        %v441 = vpop.permute.xlu0 %440
        %442 = vrot.lane.b32.xlu0 %v420, 16
        %v443 = vpop.permute.xlu0 %442
        %444 = vrot.lane.b32.xlu0 %v421, 16
        %v445 = vpop.permute.xlu0 %444
        %v454 = vmul.f32 %v382, %v431
        %v455 = vmul.f32 %v383, %v433
        %v456 = vmul.f32 %v384, %v435
        %v457 = vmul.f32 %v385, %v437
        %v458 = vmul.f32 %v386, %v439
        %v459 = vmul.f32 %v387, %v441
        %v460 = vmul.f32 %v388, %v443
        %v461 = vmul.f32 %v389, %v445
        %470 = vrot.lane.b32.xlu0 %v454, 112
        %v471 = vpop.permute.xlu0 %470
        %472 = vrot.lane.b32.xlu0 %v455, 112
        %v473 = vpop.permute.xlu0 %472
        %474 = vrot.lane.b32.xlu0 %v456, 112
        %v475 = vpop.permute.xlu0 %474
        %476 = vrot.lane.b32.xlu0 %v457, 112
        %v477 = vpop.permute.xlu0 %476
        %478 = vrot.lane.b32.xlu0 %v458, 112
        %v479 = vpop.permute.xlu0 %478
        %480 = vrot.lane.b32.xlu0 %v459, 112
        %v481 = vpop.permute.xlu0 %480
        %482 = vrot.lane.b32.xlu0 %v460, 112
        %v483 = vpop.permute.xlu0 %482
        %484 = vrot.lane.b32.xlu0 %v461, 112
        %v485 = vpop.permute.xlu0 %484
        %v494 = vsub.f32 %v406, %v471
        %v495 = vsub.f32 %v407, %v473
        %v496 = vsub.f32 %v408, %v475
        %v497 = vsub.f32 %v409, %v477
        %v498 = vsub.f32 %v410, %v479
        %v499 = vsub.f32 %v411, %v481
        %v500 = vsub.f32 %v412, %v483
        %v501 = vsub.f32 %v413, %v485
        %vm502 = vcmask 125952
        %503 = vst.msk [vmem:[%s352] sm:$0xf] %vm502, %v494
        %504 = vst.msk [vmem:[%s352 + $0x4] sm:$0xf] %vm502, %v495
        %505 = vst.msk [vmem:[%s352 + $0x8] sm:$0xf] %vm502, %v496
        %506 = vst.msk [vmem:[%s352 + $0xc] sm:$0xf] %vm502, %v497
        %507 = vst.msk [vmem:[%s352 + $0x10] sm:$0xf] %vm502, %v498
        %508 = vst.msk [vmem:[%s352 + $0x14] sm:$0xf] %vm502, %v499
        %509 = vst.msk [vmem:[%s352 + $0x18] sm:$0xf] %vm502, %v500
        %510 = vst.msk [vmem:[%s352 + $0x1c] sm:$0xf] %vm502, %v501
        %511 = vrot.lane.b32.xlu0 %v390, 16
        %v512 = vpop.permute.xlu0 %511
        %513 = vrot.lane.b32.xlu0 %v391, 16
        %v514 = vpop.permute.xlu0 %513
        %515 = vrot.lane.b32.xlu0 %v392, 16
        %v516 = vpop.permute.xlu0 %515
        %517 = vrot.lane.b32.xlu0 %v393, 16
        %v518 = vpop.permute.xlu0 %517
        %519 = vrot.lane.b32.xlu0 %v394, 16
        %v520 = vpop.permute.xlu0 %519
        %521 = vrot.lane.b32.xlu0 %v395, 16
        %v522 = vpop.permute.xlu0 %521
        %523 = vrot.lane.b32.xlu0 %v396, 16
        %v524 = vpop.permute.xlu0 %523
        %525 = vrot.lane.b32.xlu0 %v397, 16
        %v526 = vpop.permute.xlu0 %525
        %v535 = vmul.f32 %v382, %v512
        %v536 = vmul.f32 %v383, %v514
        %v537 = vmul.f32 %v384, %v516
        %v538 = vmul.f32 %v385, %v518
        %v539 = vmul.f32 %v386, %v520
        %v540 = vmul.f32 %v387, %v522
        %v541 = vmul.f32 %v388, %v524
        %v542 = vmul.f32 %v389, %v526
        %v543 = vmul.f32 %v382, %v414
        %v544 = vmul.f32 %v383, %v415
        %v545 = vmul.f32 %v384, %v416
        %v546 = vmul.f32 %v385, %v417
        %v547 = vmul.f32 %v386, %v418
        %v548 = vmul.f32 %v387, %v419
        %v549 = vmul.f32 %v388, %v420
        %v550 = vmul.f32 %v389, %v421
        %559 = vrot.lane.b32.xlu0 %v543, 16
        %v560 = vpop.permute.xlu0 %559
        %561 = vrot.lane.b32.xlu0 %v544, 16
        %v562 = vpop.permute.xlu0 %561
        %563 = vrot.lane.b32.xlu0 %v545, 16
        %v564 = vpop.permute.xlu0 %563
        %565 = vrot.lane.b32.xlu0 %v546, 16
        %v566 = vpop.permute.xlu0 %565
        %567 = vrot.lane.b32.xlu0 %v547, 16
        %v568 = vpop.permute.xlu0 %567
        %569 = vrot.lane.b32.xlu0 %v548, 16
        %v570 = vpop.permute.xlu0 %569
        %571 = vrot.lane.b32.xlu0 %v549, 16
        %v572 = vpop.permute.xlu0 %571
        %573 = vrot.lane.b32.xlu0 %v550, 16
        %v574 = vpop.permute.xlu0 %573
        %v583 = vadd.f32 %v535, %v560
        %v584 = vadd.f32 %v536, %v562
        %v585 = vadd.f32 %v537, %v564
        %v586 = vadd.f32 %v538, %v566
        %v587 = vadd.f32 %v539, %v568
        %v588 = vadd.f32 %v540, %v570
        %v589 = vadd.f32 %v541, %v572
        %v590 = vadd.f32 %v542, %v574
        %vm591 = vcmask 257152
        %592 = vst.msk [vmem:[%s352] sm:$0xf] %vm591, %v583
        %593 = vst.msk [vmem:[%s352 + $0x4] sm:$0xf] %vm591, %v584
        %594 = vst.msk [vmem:[%s352 + $0x8] sm:$0xf] %vm591, %v585
        %595 = vst.msk [vmem:[%s352 + $0xc] sm:$0xf] %vm591, %v586
        %596 = vst.msk [vmem:[%s352 + $0x10] sm:$0xf] %vm591, %v587
        %597 = vst.msk [vmem:[%s352 + $0x14] sm:$0xf] %vm591, %v588
        %598 = vst.msk [vmem:[%s352 + $0x18] sm:$0xf] %vm591, %v589
        %599 = vst.msk [vmem:[%s352 + $0x1c] sm:$0xf] %vm591, %v590
        %v600 = vld [vmem:[%s322] sm:$0xf]
        %v601 = vld [vmem:[%s322 + $0x4] sm:$0xf]
        %v602 = vld [vmem:[%s322 + $0x8] sm:$0xf]
        %v603 = vld [vmem:[%s322 + $0xc] sm:$0xf]
        %v604 = vld [vmem:[%s322 + $0x10] sm:$0xf]
        %v605 = vld [vmem:[%s322 + $0x14] sm:$0xf]
        %v606 = vld [vmem:[%s322 + $0x18] sm:$0xf]
        %v607 = vld [vmem:[%s322 + $0x1c] sm:$0xf]
        %v608 = vmul.f32 %v600, %v390
        %v609 = vmul.f32 %v601, %v391
        %v610 = vmul.f32 %v602, %v392
        %v611 = vmul.f32 %v603, %v393
        %v612 = vmul.f32 %v604, %v394
        %v613 = vmul.f32 %v605, %v395
        %v614 = vmul.f32 %v606, %v396
        %v615 = vmul.f32 %v607, %v397
        %v616 = vmul.f32 %v600, %v431
        %v617 = vmul.f32 %v601, %v433
        %v618 = vmul.f32 %v602, %v435
        %v619 = vmul.f32 %v603, %v437
        %v620 = vmul.f32 %v604, %v439
        %v621 = vmul.f32 %v605, %v441
        %v622 = vmul.f32 %v606, %v443
        %v623 = vmul.f32 %v607, %v445
        %632 = vrot.lane.b32.xlu0 %v616, 112
        %v633 = vpop.permute.xlu0 %632
        %634 = vrot.lane.b32.xlu0 %v617, 112
        %v635 = vpop.permute.xlu0 %634
        %636 = vrot.lane.b32.xlu0 %v618, 112
        %v637 = vpop.permute.xlu0 %636
        %638 = vrot.lane.b32.xlu0 %v619, 112
        %v639 = vpop.permute.xlu0 %638
        %640 = vrot.lane.b32.xlu0 %v620, 112
        %v641 = vpop.permute.xlu0 %640
        %642 = vrot.lane.b32.xlu0 %v621, 112
        %v643 = vpop.permute.xlu0 %642
        %644 = vrot.lane.b32.xlu0 %v622, 112
        %v645 = vpop.permute.xlu0 %644
        %646 = vrot.lane.b32.xlu0 %v623, 112
        %v647 = vpop.permute.xlu0 %646
        %v656 = vsub.f32 %v608, %v633
        %v657 = vsub.f32 %v609, %v635
        %v658 = vsub.f32 %v610, %v637
        %v659 = vsub.f32 %v611, %v639
        %v660 = vsub.f32 %v612, %v641
        %v661 = vsub.f32 %v613, %v643
        %v662 = vsub.f32 %v614, %v645
        %v663 = vsub.f32 %v615, %v647
        %664 = vst.msk [vmem:[%s359] sm:$0xf] %vm502, %v656
        %665 = vst.msk [vmem:[%s359 + $0x4] sm:$0xf] %vm502, %v657
        %666 = vst.msk [vmem:[%s359 + $0x8] sm:$0xf] %vm502, %v658
        %667 = vst.msk [vmem:[%s359 + $0xc] sm:$0xf] %vm502, %v659
        %668 = vst.msk [vmem:[%s359 + $0x10] sm:$0xf] %vm502, %v660
        %669 = vst.msk [vmem:[%s359 + $0x14] sm:$0xf] %vm502, %v661
        %670 = vst.msk [vmem:[%s359 + $0x18] sm:$0xf] %vm502, %v662
        %671 = vst.msk [vmem:[%s359 + $0x1c] sm:$0xf] %vm502, %v663
        %v672 = vmul.f32 %v600, %v512
        %v673 = vmul.f32 %v601, %v514
        %v674 = vmul.f32 %v602, %v516
        %v675 = vmul.f32 %v603, %v518
        %v676 = vmul.f32 %v604, %v520
        %v677 = vmul.f32 %v605, %v522
        %v678 = vmul.f32 %v606, %v524
        %v679 = vmul.f32 %v607, %v526
        %v680 = vmul.f32 %v600, %v414
        %v681 = vmul.f32 %v601, %v415
        %v682 = vmul.f32 %v602, %v416
        %v683 = vmul.f32 %v603, %v417
        %v684 = vmul.f32 %v604, %v418
        %v685 = vmul.f32 %v605, %v419
        %v686 = vmul.f32 %v606, %v420
        %v687 = vmul.f32 %v607, %v421
        %696 = vrot.lane.b32.xlu0 %v680, 16
        %v697 = vpop.permute.xlu0 %696
        %698 = vrot.lane.b32.xlu0 %v681, 16
        %v699 = vpop.permute.xlu0 %698
        %700 = vrot.lane.b32.xlu0 %v682, 16
        %v701 = vpop.permute.xlu0 %700
        %702 = vrot.lane.b32.xlu0 %v683, 16
        %v703 = vpop.permute.xlu0 %702
        %704 = vrot.lane.b32.xlu0 %v684, 16
        %v705 = vpop.permute.xlu0 %704
        %706 = vrot.lane.b32.xlu0 %v685, 16
        %v707 = vpop.permute.xlu0 %706
        %708 = vrot.lane.b32.xlu0 %v686, 16
        %v709 = vpop.permute.xlu0 %708
        %710 = vrot.lane.b32.xlu0 %v687, 16
        %v711 = vpop.permute.xlu0 %710
        %v720 = vadd.f32 %v672, %v697
        %v721 = vadd.f32 %v673, %v699
        %v722 = vadd.f32 %v674, %v701
        %v723 = vadd.f32 %v675, %v703
        %v724 = vadd.f32 %v676, %v705
        %v725 = vadd.f32 %v677, %v707
        %v726 = vadd.f32 %v678, %v709
        %v727 = vadd.f32 %v679, %v711
        %728 = vst.msk [vmem:[%s359] sm:$0xf] %vm591, %v720
        %729 = vst.msk [vmem:[%s359 + $0x4] sm:$0xf] %vm591, %v721
        %730 = vst.msk [vmem:[%s359 + $0x8] sm:$0xf] %vm591, %v722
        %731 = vst.msk [vmem:[%s359 + $0xc] sm:$0xf] %vm591, %v723
        %732 = vst.msk [vmem:[%s359 + $0x10] sm:$0xf] %vm591, %v724
        %733 = vst.msk [vmem:[%s359 + $0x14] sm:$0xf] %vm591, %v725
        %734 = vst.msk [vmem:[%s359 + $0x18] sm:$0xf] %vm591, %v726
        %735 = vst.msk [vmem:[%s359 + $0x1c] sm:$0xf] %vm591, %v727
        %s736 = sand.u32 %s155, 1
        %s737 = scalar_lea.sflag [#allocation4], %s736
        %s738 = sand.u32 %s155, 1
        %s739 = smul.addr %s738, 32
        %s740 = scalar_lea.vmem [#allocation9], %s739
        %s741 = sand.u32 %s183, 1
        %s742 = scalar_lea.sflag [#allocation11], %s741
        %s743 = sand.u32 %s183, 1
        %s744 = smul.addr %s743, 32
        %s745 = scalar_lea.vmem [#allocation10], %s744
        // Predicated region
        $region53: #{tpu_custom_call.1} parent=35 // pred_check
          %p746 = pneg %p165
        $region54: #{tpu_custom_call.1} parent=35 // pred_check_branch
          %748 = sbr.rel (%p746) target = $region56
        $region55: #{tpu_custom_call.1} parent=35 // pred_region
          %s749 = smul.u32 8, %s29
          %751 = vsyncadd %s737, 0
          %s752 = smul.addr %s30, 8
          %s753 = sadd.s32 %s749, %s752
          %s754 = smul.addr %s753, 4
          %s755 = scalar_lea.hbm %s4, %s754
          %s756 = sshll.u32 %s740, 4
          %s757 = int_to_ptr.vmem [resolvable:$true] %s756
          %s758 = sshll.u32 %s755, 4
          %s759 = int_to_ptr.hbm [resolvable:$true] %s758
          %764 = dma.vmem_to_hbm [thread:$0]  %s757, 512, %s759, %s737, 64, 64, 4
        $region56: #{tpu_custom_call.1} parent=35 // pred_fallthru
          _
        // Predicated region
        $region57: #{tpu_custom_call.1} parent=35 // pred_check
          %p765 = pneg %p193
        $region58: #{tpu_custom_call.1} parent=35 // pred_check_branch
          %767 = sbr.rel (%p765) target = $region60
        $region59: #{tpu_custom_call.1} parent=35 // pred_region
          %s768 = smul.u32 8, %s29
          %770 = vsyncadd %s742, 0
          %s771 = smul.addr %s30, 8
          %s772 = sadd.s32 %s768, %s771
          %s773 = smul.addr %s772, 4
          %s774 = scalar_lea.hbm %s5, %s773
          %s775 = sshll.u32 %s745, 4
          %s776 = int_to_ptr.vmem [resolvable:$true] %s775
          %s777 = sshll.u32 %s774, 4
          %s778 = int_to_ptr.hbm [resolvable:$true] %s777
          %783 = dma.vmem_to_hbm [thread:$0]  %s776, 512, %s778, %s742, 64, 64, 4
        $region60: #{tpu_custom_call.1} parent=35 // pred_fallthru
          _
      $region36: #{tpu_custom_call.1} parent=5 // pred_fallthru
        _
      %p784 = scmp.le.s32.totalorder 2, %s20
      // Predicated region
      $region61: #{tpu_custom_call.1} parent=5 // pred_check
        %p785 = pneg %p784
      $region62: #{tpu_custom_call.1} parent=5 // pred_check_branch
        %787 = sbr.rel (%p785) target = $region64
      $region63: #{tpu_custom_call.1} parent=5 // pred_region
        %s788 = ssub.s32 %s20, 2
        // Predicated region
        $region65: #{tpu_custom_call.1} parent=63 // pred_check
          %p789 = pneg %p171
        $region66: #{tpu_custom_call.1} parent=63 // pred_check_branch
          %791 = sbr.rel (%p789) target = $region68
        $region67: #{tpu_custom_call.1} parent=63 // pred_region
          %s792 = sand.u32 %s156, 1
          %s793 = scalar_lea.sflag [#allocation4], %s792
          %s794 = sand.u32 %s156, 1
          %s795 = smul.addr %s794, 32
          %s796 = scalar_lea.vmem [#allocation9], %s795
          %798 = dma.done %s793, 512
        $region68: #{tpu_custom_call.1} parent=63 // pred_fallthru
          _
        // Predicated region
        $region69: #{tpu_custom_call.1} parent=63 // pred_check
          %p799 = pneg %p199
        $region70: #{tpu_custom_call.1} parent=63 // pred_check_branch
          %801 = sbr.rel (%p799) target = $region72
        $region71: #{tpu_custom_call.1} parent=63 // pred_region
          %s802 = sand.u32 %s184, 1
          %s803 = scalar_lea.sflag [#allocation11], %s802
          %s804 = sand.u32 %s184, 1
          %s805 = smul.addr %s804, 32
          %s806 = scalar_lea.vmem [#allocation10], %s805
          %808 = dma.done %s803, 512
        $region72: #{tpu_custom_call.1} parent=63 // pred_fallthru
          _
      $region64: #{tpu_custom_call.1} parent=5 // pred_fallthru
        _
    $region6: #{tpu_custom_call.1} parent=1 // loop_footer
      %s24 = sadd.s32 1, %s20
    $region7: #{tpu_custom_call.1} parent=1 // loop_footer_branch
      %19 = sbr.rel target = $region3
    $region8: #{tpu_custom_call.1} parent=1 // loop_exit
      _
    %809 = vsyncpa [#allocation3], 1
    %s810 = scalar_lea.sflag [#allocation3], 1
    %811 = vsyncpa %s810, 1
    %812 = vsyncpa [#allocation6], 1
    %813 = vsyncpa [#allocation4], 1
    %s814 = scalar_lea.sflag [#allocation4], 1
    %815 = vsyncpa %s814, 1
    %816 = vsyncpa [#allocation11], 1
    %s817 = scalar_lea.sflag [#allocation11], 1
    %818 = vsyncpa %s817, 1

</llo_original>
